<compile_context>
chip_gen: v7x
topology: tpu7x:2x2x1
jax: 0.10.0
libtpu: 0.0.40
codegen_flags: <defaults>
</compile_context>

<pallas_src>
import jax
import jax.numpy as jnp
from jax.experimental import pallas as pl
from jax.experimental.pallas import tpu as pltpu


# ----------------------------------------------------------------------------
# Pallas kernel: fused matmul + bias + activation-mixture epilogue
# ----------------------------------------------------------------------------
def supernet_kernel(a_sig_ref, x_ref, w_ref, b_ref, o_ref):
    # a_sig_ref: SMEM (2,)  f32   softmax(A_sig) mixture weights
    # x_ref:     VMEM (tm, In)    bf16 (or f32) batch-row tile
    # w_ref:     VMEM (In, tn)    bf16 (or f32) weight column tile
    # b_ref:     VMEM (1, tn)     f32 bias row
    # o_ref:     VMEM (tm, tn)    f32 output tile (lane-dense: tn % 128 == 0)
    z = jnp.dot(x_ref[...], w_ref[...], preferred_element_type=jnp.float32)
    z = z + b_ref[...]                                  # broadcast (1, tn)
    a_lin = a_sig_ref[0]
    # a_lin*z + a_rel*relu(z) == where(z>0, z, a_lin*z)  since a_lin+a_rel == 1
    # (softmax).  Keep the 2-term form if the mixing ever stops being softmax.
    o_ref[...] = jnp.where(z > 0.0, z, a_lin * z).astype(o_ref.dtype)


def supernet_forward_pallas(x, w_core, b_core, a_soft, *, tm=256, tn=128,
                            use_bf16=True):
    """out = a0*(xW+b) + a1*relu(xW+b), tiled over (batch, out_features)."""
    B, In = x.shape
    Out = w_core.shape[1]

    # ---- tile sizing & wrapper-side padding (lane-dense output) ------------
    tn = max(128, tn)                                   # lane-dense stores
    out_p = pl.cdiv(Out, tn) * tn
    tm_eff = min(tm, ((B + 7) // 8) * 8)                # don't over-tile tiny B
    b_p = pl.cdiv(B, tm_eff) * tm_eff

    cdtype = jnp.bfloat16 if use_bf16 else jnp.float32
    x_p = jnp.pad(x, ((0, b_p - B), (0, 0))).astype(cdtype)
    w_p = jnp.pad(w_core, ((0, 0), (0, out_p - Out))).astype(cdtype)
    b2d = jnp.pad(b_core, (0, out_p - Out)).reshape(1, out_p).astype(jnp.float32)

    grid = (b_p // tm_eff, out_p // tn)

    out = pl.pallas_call(
        supernet_kernel,
        out_shape=jax.ShapeDtypeStruct((b_p, out_p), jnp.float32),
        grid=grid,
        in_specs=[
            pl.BlockSpec(memory_space=pltpu.MemorySpace.SMEM),      # a_soft
            pl.BlockSpec((tm_eff, In), lambda i, j: (i, 0)),        # X rows
            pl.BlockSpec((In, tn),     lambda i, j: (0, j)),        # W cols
            pl.BlockSpec((1, tn),      lambda i, j: (0, j)),        # bias
        ],
        out_specs=pl.BlockSpec((tm_eff, tn), lambda i, j: (i, j)),
        compiler_params=pltpu.CompilerParams(
            dimension_semantics=("parallel", "parallel")),
    )(a_soft, x_p, w_p, b2d)

    return out[:B, :Out]


# ----------------------------------------------------------------------------
# Plain-JAX glue: build W_core / b_core exactly like SuperNet_Layer.get_layers
# ----------------------------------------------------------------------------
def build_w_core(w_seed_mat, w_sig):
    """W_available = ['dense', 'Toeplitz']."""
    In, Out = w_seed_mat.shape
    dense = w_seed_mat
    if Out > 1:
        first_row_rev = w_seed_mat[0, 1:][::-1]          # [row0[Out-1],...,row0[1]]
        w_seed_vec = jnp.concatenate([first_row_rev, w_seed_mat[:, 0]])
    else:
        w_seed_vec = w_seed_mat[:, 0]
    # toeplitz[i, j] = w_seed_vec[Out - 1 - j + i]  -- single vectorized gather
    row = jax.lax.broadcasted_iota(jnp.int32, (In, Out), 0)
    col = jax.lax.broadcasted_iota(jnp.int32, (In, Out), 1)
    toeplitz = w_seed_vec[(Out - 1 - col) + row]
    w_soft = jax.nn.softmax(w_sig)                       # (2,)
    return w_soft[0] * dense + w_soft[1] * toeplitz      # (In, Out)


def build_b_core(b_seed, b_sig):
    """b_available = ['dense', 'None'] -> softmax-weighted mix of b_seed and 0."""
    b_soft = jax.nn.softmax(b_sig)
    return b_soft[0] * b_seed                            # (Out,)


def supernet_layer_forward(x, params, *, use_bf16=True):
    w_core = build_w_core(params['W_layer_seed'], params['W_sig'])
    b_core = build_b_core(params['b_layer_seed'], params['b_sig'])
    a_soft = jax.nn.softmax(params['A_sig'])             # (2,)
    return supernet_forward_pallas(x, w_core, b_core, a_soft, use_bf16=use_bf16)


def reference_forward(x, params, *, use_bf16=True):
    w_core = build_w_core(params['W_layer_seed'], params['W_sig'])
    b_core = build_b_core(params['b_layer_seed'], params['b_sig'])
    a_soft = jax.nn.softmax(params['A_sig'])
    if use_bf16:  # mirror the kernel's MXU input rounding
        xr = x.astype(jnp.bfloat16).astype(jnp.float32)
        wr = w_core.astype(jnp.bfloat16).astype(jnp.float32)
    else:
        xr, wr = x, w_core
    z = xr @ wr + b_core
    return a_soft[0] * z + a_soft[1] * jnp.maximum(z, 0.0)


# ----------------------------------------------------------------------------
if __name__ == "__main__":
    # Ragged batch + non-128 output width to exercise the padding/tiling path.
    B, IN, OUT = 13, 32, 48
    key = jax.random.PRNGKey(0)
    kx, kw, kb = jax.random.split(key, 3)

    params = {
        'W_layer_seed': jax.random.normal(kw, (IN, OUT), jnp.float32)
                        / jnp.sqrt(jnp.float32(IN)),
        'b_layer_seed': 0.01 * jax.random.normal(kb, (OUT,), jnp.float32),
        'W_sig': jnp.zeros((2,), jnp.float32),   # len(W_available) = 2
        'b_sig': jnp.zeros((2,), jnp.float32),   # len(b_available) = 2
        'A_sig': jnp.zeros((2,), jnp.float32),   # len(A_available) = 2
    }

    x = jax.random.normal(kx, (B, IN), jnp.float32)

    out = supernet_layer_forward(x, params)
    out = jax.block_until_ready(out)

    ref = reference_forward(x, params)
    assert out.shape == (B, OUT)
    assert jnp.allclose(out, ref, atol=1e-4, rtol=1e-3), \
        float(jnp.max(jnp.abs(out - ref)))

    print("KERNEL_OK")
</pallas_src>

<mosaic_0001>
module attributes {stable_mosaic.version = 11 : i64} {
  func.func @supernet_kernel(%arg0: i32, %arg1: i32, %arg2: memref<2xf32, #tpu.memory_space<smem>>, %arg3: memref<16x32xbf16, #tpu.memory_space<vmem>>, %arg4: memref<32x128xbf16, #tpu.memory_space<vmem>>, %arg5: memref<1x128xf32, #tpu.memory_space<vmem>>, %arg6: memref<16x128xf32, #tpu.memory_space<vmem>>) attributes {dimension_semantics = [#tpu.dimension_semantics<parallel>, #tpu.dimension_semantics<parallel>], iteration_bounds = array<i64: 1, 1>, scalar_prefetch = 0 : i64, scratch_operands = 0 : i64, tpu.core_type = #tpu.core_type<tc>, window_params = [{transform_indices = @transform_0, window_bounds = array<i64: 2>}, {transform_indices = @transform_1, window_bounds = array<i64: 16, 32>}, {transform_indices = @transform_2, window_bounds = array<i64: 32, 128>}, {transform_indices = @transform_3, window_bounds = array<i64: 1, 128>}, {transform_indices = @transform_4, window_bounds = array<i64: 16, 128>}]} {
    %c0 = arith.constant 0 : index
    %c0_0 = arith.constant 0 : index
    %0 = vector.load %arg3[%c0, %c0_0] : memref<16x32xbf16, #tpu.memory_space<vmem>>, vector<16x32xbf16>
    %c0_1 = arith.constant 0 : index
    %c0_2 = arith.constant 0 : index
    %1 = vector.load %arg4[%c0_1, %c0_2] : memref<32x128xbf16, #tpu.memory_space<vmem>>, vector<32x128xbf16>
    %cst = arith.constant dense<0.000000e+00> : vector<16x128xf32>
    %2 = tpu.matmul %0, %1, %cst {dimension_numbers = #tpu.dot_dimension_numbers<[1], [0], [0], [1], [0, 0, 1, 1], [], []>} : vector<16x32xbf16>, vector<32x128xbf16>, vector<16x128xf32> -> vector<16x128xf32>
    %c0_3 = arith.constant 0 : index
    %c0_4 = arith.constant 0 : index
    %3 = vector.load %arg5[%c0_3, %c0_4] : memref<1x128xf32, #tpu.memory_space<vmem>>, vector<1x128xf32>
    %4 = vector.broadcast %3 : vector<1x128xf32> to vector<16x128xf32>
    %5 = arith.addf %2, %4 : vector<16x128xf32>
    %c0_5 = arith.constant 0 : index
    %6 = memref.load %arg2[%c0_5] : memref<2xf32, #tpu.memory_space<smem>>
    %cst_6 = arith.constant 0.000000e+00 : f32
    %7 = vector.broadcast %cst_6 : f32 to vector<16x128xf32>
    %8 = arith.cmpf ogt, %5, %7 : vector<16x128xf32>
    %9 = vector.broadcast %6 : f32 to vector<16x128xf32>
    %10 = arith.mulf %9, %5 : vector<16x128xf32>
    %11 = arith.select %8, %5, %10 : vector<16x128xi1>, vector<16x128xf32>
    %c0_7 = arith.constant 0 : index
    %c0_8 = arith.constant 0 : index
    %12 = vector.load %arg6[%c0_7, %c0_8] : memref<16x128xf32, #tpu.memory_space<vmem>>, vector<16x128xf32>
    tpu.vector_store %arg6[%c0_7, %c0_8], %11 {strides = array<i32>} : memref<16x128xf32, #tpu.memory_space<vmem>>, vector<16x128xf32>,
    return
  }
  func.func @transform_0(%arg0: i32, %arg1: i32) -> i32 {
    %c0_i32 = arith.constant 0 : i32
    %c0_i32_0 = arith.constant 0 : i32
    return %c0_i32 : i32
  }
  func.func @transform_1(%arg0: i32, %arg1: i32) -> (i32, i32) {
    %c0_i32 = arith.constant 0 : i32
    %c0_i32_0 = arith.constant 0 : i32
    return %arg0, %c0_i32 : i32, i32
  }
  func.func @transform_2(%arg0: i32, %arg1: i32) -> (i32, i32) {
    %c0_i32 = arith.constant 0 : i32
    %c0_i32_0 = arith.constant 0 : i32
    return %c0_i32, %arg1 : i32, i32
  }
  func.func @transform_3(%arg0: i32, %arg1: i32) -> (i32, i32) {
    %c0_i32 = arith.constant 0 : i32
    %c0_i32_0 = arith.constant 0 : i32
    return %c0_i32, %arg1 : i32, i32
  }
  func.func @transform_4(%arg0: i32, %arg1: i32) -> (i32, i32) {
    %c0_i32 = arith.constant 0 : i32
    return %arg0, %arg1 : i32, i32
  }
}

</mosaic_0001>

<llo_original>
// kernel: tpu_custom_call.1
$region0: #{tpu_custom_call.1}
  #allocation0 [shape = 'u32[]', space=smem, size = 0x4, offset = 0x4, fixed_abs, tag = 'smem constant byte address 0x4 - core index']
  #allocation1 [shape = 'u32[144,128]{1,0:T(1,128)}', space=vmem, size = 0x12000, scoped, tag = 'internal scratch']
  %s0 = inlined_call_operand.hbm [shape: f32[2], index: 0, kind: input, shape index: {}]
  %s1 = inlined_call_operand.hbm [shape: bf16[16,32], index: 1, kind: input, shape index: {}]
  %s2 = inlined_call_operand.hbm [shape: bf16[32,128], index: 2, kind: input, shape index: {}]
  %s3 = inlined_call_operand.vmem [shape: f32[1,128], index: 3, kind: input, shape index: {}]
  %s4 = inlined_call_operand.hbm [shape: f32[16,128], index: 4, kind: output, shape index: {}]
  %s5 = sld [smem:[#allocation0]]
  $region38: #{tpu_custom_call.1} parent=0
    _
  %s7 = ssub.s32 1, %s5
  %s8 = scalar_select 0, %s7, %s5
  $region1: #{tpu_custom_call.1} parent=0
    #allocation2 [shape = 'u8[512]{0}', space=smem, size = 0x200, scoped, tag = 'input window, operand 0, single buffered']
    #allocation3 [shape = 's32[1]{0}', space=sflag, size = 0x4, scoped, tag = 'scoped memory for tpu_custom_call.1']
    #allocation4 [shape = 's32[1]{0}', space=sflag, size = 0x4, scoped, tag = 'scoped memory for tpu_custom_call.1']
    #allocation5 [shape = 's32[1]{0}', space=sflag, size = 0x4, scoped, tag = 'scoped memory for tpu_custom_call.1']
    #allocation6 [shape = 'u8[4096]{0}', space=vmem, size = 0x1000, scoped, tag = 'input window, operand 1, single buffered']
    #allocation7 [shape = 'u8[8192]{0}', space=vmem, size = 0x2000, scoped, tag = 'input window, operand 2, single buffered']
    #allocation8 [shape = 's32[1]{0}', space=sflag, size = 0x4, scoped, tag = 'scoped memory for tpu_custom_call.1']
    #allocation9 [shape = 'u8[8192]{0}', space=vmem, size = 0x2000, scoped, tag = 'output window, operand 0, single buffered']
    %9 = vsyncpa [#allocation5], 0
    %10 = vsyncpa [#allocation3], 0
    %11 = vsyncpa [#allocation8], 0
    %12 = vsyncpa [#allocation4], 0
    // Predicated region
    $region2: #{tpu_custom_call.1} parent=1 // pred_check
      _
    $region3: #{tpu_custom_call.1} parent=1 // pred_check_branch
      %14 = sbr.rel (0) target = $region5
    $region4: #{tpu_custom_call.1} parent=1 // pred_region
      %s16 = ssub.s32 16, 16
      %17 = vsyncadd [#allocation5], %s16
      %20 = dma.hbm_to_smem %s0, 16, [#allocation2], [#allocation5]
    $region5: #{tpu_custom_call.1} parent=1 // pred_fallthru
      _
    // Predicated region
    $region6: #{tpu_custom_call.1} parent=1 // pred_check
      _
    $region7: #{tpu_custom_call.1} parent=1 // pred_check_branch
      %22 = sbr.rel (0) target = $region9
    $region8: #{tpu_custom_call.1} parent=1 // pred_region
      %s24 = ssub.s32 128, 128
      %25 = vsyncadd [#allocation3], %s24
      %s26 = sshll.u32 [#allocation6], 4
      %s27 = int_to_ptr.vmem [resolvable:$true] %s26
      %32 = dma.hbm_to_vmem [thread:$0]  %s1, 128, %s27, [#allocation3], 64, 64, 4
    $region9: #{tpu_custom_call.1} parent=1 // pred_fallthru
      _
    // Predicated region
    $region10: #{tpu_custom_call.1} parent=1 // pred_check
      _
    $region11: #{tpu_custom_call.1} parent=1 // pred_check_branch
      %34 = sbr.rel (0) target = $region13
    $region12: #{tpu_custom_call.1} parent=1 // pred_region
      %s36 = ssub.s32 256, 256
      %37 = vsyncadd [#allocation8], %s36
      %s38 = sshll.u32 [#allocation7], 4
      %s39 = int_to_ptr.vmem [resolvable:$true] %s38
      %44 = dma.hbm_to_vmem [thread:$0]  %s2, 256, %s39, [#allocation8], 64, 64, 4
    $region13: #{tpu_custom_call.1} parent=1 // pred_fallthru
      _
    // Predicated region
    $region14: #{tpu_custom_call.1} parent=1 // pred_check
      _
    $region15: #{tpu_custom_call.1} parent=1 // pred_check_branch
      %46 = sbr.rel (0) target = $region17
    $region16: #{tpu_custom_call.1} parent=1 // pred_region
      _
    $region17: #{tpu_custom_call.1} parent=1 // pred_fallthru
      _
    // Predicated region
    $region18: #{tpu_custom_call.1} parent=1 // pred_check
      _
    $region19: #{tpu_custom_call.1} parent=1 // pred_check_branch
      %48 = sbr.rel (0) target = $region21
    $region20: #{tpu_custom_call.1} parent=1 // pred_region
      %49 = dma.done [#allocation5], 16
    $region21: #{tpu_custom_call.1} parent=1 // pred_fallthru
      _
    // Predicated region
    $region22: #{tpu_custom_call.1} parent=1 // pred_check
      _
    $region23: #{tpu_custom_call.1} parent=1 // pred_check_branch
      %51 = sbr.rel (0) target = $region25
    $region24: #{tpu_custom_call.1} parent=1 // pred_region
      %52 = dma.done [#allocation3], 128
    $region25: #{tpu_custom_call.1} parent=1 // pred_fallthru
      _
    // Predicated region
    $region26: #{tpu_custom_call.1} parent=1 // pred_check
      _
    $region27: #{tpu_custom_call.1} parent=1 // pred_check_branch
      %54 = sbr.rel (0) target = $region29
    $region28: #{tpu_custom_call.1} parent=1 // pred_region
      %55 = dma.done [#allocation8], 256
    $region29: #{tpu_custom_call.1} parent=1 // pred_fallthru
      _
    %56 = sfence
    %v58 = vld [vmem:[#allocation6] sm:$0xf]
    %v59 = vld [vmem:[#allocation6 + $0x4] sm:$0xf]
    %v60 = vld [vmem:[#allocation7] sm:$0xf]
    %v61 = vld [vmem:[#allocation7 + $0x4] sm:$0xf]
    %v62 = vld [vmem:[#allocation7 + $0x8] sm:$0xf]
    %v63 = vld [vmem:[#allocation7 + $0xc] sm:$0xf]
    %v64 = vld [vmem:[%s3] sm:$0x1]
    %v66 = vlaneseq
    %v67 = vshrl.u32 %v66, 7
    %v68 = vsub.s32 0, %v67
    %v69 = vrot.slane %v64, %v68
    %v73 = vunpack.c.l.b16 %v58
    %v74 = vunpack.c.l.b16 %v59
    %v75 = vpack.c.b16 %v74, %v73
    %v80 = vunpack.c.l.b16 %v60
    %v81 = vunpack.c.l.b16 %v61
    %v82 = vunpack.c.l.b16 %v62
    %v83 = vunpack.c.l.b16 %v63
    %v84 = vpack.c.b16 %v81, %v80
    %v85 = vpack.c.b16 %v83, %v82
    %vm88 = vcmask 261120
    %v90 = vsel %vm88, %v75, 0
    %92 = vmatprep.subr.bf16.mxu0 0
    %93 = vmatpush1.bf16.msra.mxu0 %v84
    %94 = vmatprep.subr.bf16.mxu0 0
    %95 = vmatpush1.bf16.msra.mxu0 %v85
    %96 = vmatprep.subr.bf16.mxu0 0
    %97 = vmatpush1.bf16.msra.mxu0 0
    %98 = vmatprep.subr.bf16.mxu0 0
    %99 = vmatpush1.bf16.msra.mxu0 0
    %100 = vmatprep.subr.bf16.mxu0 0
    %101 = vmatpush1.bf16.msra.mxu0 0
    %102 = vmatprep.subr.bf16.mxu0 0
    %103 = vmatpush1.bf16.msra.mxu0 0
    %104 = vmatprep.subr.bf16.mxu0 0
    %105 = vmatpush1.bf16.msra.mxu0 0
    %106 = vmatprep.subr.bf16.mxu0 0
    %107 = vmatpush1.bf16.msra.mxu0 0
    %108 = vmatprep.subr.bf16.mxu0 0
    %109 = vmatpush1.bf16.msra.mxu0 0
    %110 = vmatprep.subr.bf16.mxu0 0
    %111 = vmatpush1.bf16.msra.mxu0 0
    %112 = vmatprep.subr.bf16.mxu0 0
    %113 = vmatpush1.bf16.msra.mxu0 0
    %114 = vmatprep.subr.bf16.mxu0 0
    %115 = vmatpush1.bf16.msra.mxu0 0
    %116 = vmatprep.subr.bf16.mxu0 0
    %117 = vmatpush1.bf16.msra.mxu0 0
    %118 = vmatprep.subr.bf16.mxu0 0
    %119 = vmatpush1.bf16.msra.mxu0 0
    %120 = vmatprep.subr.bf16.mxu0 0
    %121 = vmatpush1.bf16.msra.mxu0 0
    %122 = vmatprep.subr.bf16.mxu0 0
    %123 = vmatpush1.bf16.msra.mxu0 0
    %124 = vmatprep.mubr.bf16.mxu0 0
    %125 = vmatmul.mubr.bf16.gmra.mrb[0].mxu0 %v90
    %v126 = vpop.f32.mrb[0].mxu0
    %v127 = vadd.f32 %v69, %v126
    %v128 = vpop.f32.mrb[0].mxu0
    %v129 = vpop.f32.mrb[0].mxu0
    %v130 = vadd.f32 %v69, %v129
    %v131 = vpop.f32.mrb[0].mxu0
    %132 = vdwg.mxu0
    %s133 = sld [smem:[#allocation2]]
    %vm134 = vcmp.gt.f32.partialorder %v127, 0.0
    %vm135 = vcmp.gt.f32.partialorder %v130, 0.0
    %v136 = vstv %s133
    %v137 = vmul.f32 %v136, %v127
    %v138 = vmul.f32 %v136, %v130
    %v139 = vsel %vm134, %v127, %v137
    %v140 = vsel %vm135, %v130, %v138
    %141 = vst [vmem:[#allocation9] sm:$0xff] %v139
    %142 = vst [vmem:[#allocation9 + $0x8] sm:$0xff] %v140
    // Predicated region
    $region30: #{tpu_custom_call.1} parent=1 // pred_check
      _
    $region31: #{tpu_custom_call.1} parent=1 // pred_check_branch
      %144 = sbr.rel (0) target = $region33
    $region32: #{tpu_custom_call.1} parent=1 // pred_region
      %s146 = ssub.s32 256, 256
      %147 = vsyncadd [#allocation4], %s146
      %s148 = sshll.u32 [#allocation9], 4
      %s149 = int_to_ptr.vmem [resolvable:$true] %s148
      %154 = dma.vmem_to_hbm [thread:$0]  %s149, 256, %s4, [#allocation4], 128, 128, 8
    $region33: #{tpu_custom_call.1} parent=1 // pred_fallthru
      _
    // Predicated region
    $region34: #{tpu_custom_call.1} parent=1 // pred_check
      _
    $region35: #{tpu_custom_call.1} parent=1 // pred_check_branch
      %156 = sbr.rel (0) target = $region37
    $region36: #{tpu_custom_call.1} parent=1 // pred_region
      %157 = dma.done [#allocation4], 256
    $region37: #{tpu_custom_call.1} parent=1 // pred_fallthru
      _
    %158 = vsyncpa [#allocation3], 1
    %159 = vsyncpa [#allocation8], 1
    %160 = vsyncpa [#allocation4], 1
    %161 = vsyncpa [#allocation5], 1

</llo_original>
